<compile_context>
chip_gen: v6e
topology: v6e:2x2x1
jax: 0.10.0
libtpu: 0.0.40
codegen_flags: <defaults>
</compile_context>

<pallas_src>
import functools

import jax
import jax.numpy as jnp
from jax.experimental import pallas as pl
from jax.experimental.pallas import tpu as pltpu

_NEG_BIG = -1e30  # mask value baked into padded b2 columns


def _round_up(x: int, m: int) -> int:
    return ((x + m - 1) // m) * m


def _gumbel_mlp_kernel(x_ref, w1_ref, b1_ref, w2_ref, b2_ref, g_ref,
                       y_ref, *opt_logits, inv_tau, hard):
    # ---- fc1 -> ReLU -> fc2 (bf16 MXU inputs, f32 accumulation) ----
    h = jnp.dot(x_ref[...], w1_ref[...],
                preferred_element_type=jnp.float32) + b1_ref[...]
    h = jnp.maximum(h, 0.0)
    logits = jnp.dot(h.astype(jnp.bfloat16), w2_ref[...],
                     preferred_element_type=jnp.float32) + b2_ref[...]
    if opt_logits:                       # test/debug path only
        opt_logits[0][...] = logits

    # Padded logit columns carry a -1e30 bias (baked into b2), so they can
    # never win the max / softmax below.
    z = (logits + g_ref[...].astype(jnp.float32)) * inv_tau

    m = jnp.max(z, axis=-1, keepdims=True)
    if hard:
        # Tie-safe one-hot of the first maximum (forward value of the
        # straight-through hard Gumbel-softmax).
        # TODO(synk): straight-through gradient (y_hard - sg(y_soft) + y_soft)
        # is a backward-pass construct (needs custom_vjp); forward value is
        # identical to the one-hot below.
        col = jax.lax.broadcasted_iota(jnp.int32, z.shape, 1)
        idx = jnp.min(jnp.where(z == m, col, z.shape[-1]), axis=-1,
                      keepdims=True)
        y = (col == idx).astype(jnp.float32)
    else:
        e = jnp.exp(z - m)
        s = jnp.sum(e, axis=-1, keepdims=True)
        y = e / s
    y_ref[...] = y.astype(y_ref.dtype)


def init_params(key, input_dim, hidden_dim, output_dim):
    """PyTorch nn.Linear-style init; hidden/output dims padded to 128 lanes,
    input dim kept at its true width; padded-column mask baked into b2."""
    p_hid = _round_up(hidden_dim, 128)
    p_out = _round_up(output_dim, 128)
    k1w, k1b, k2w, k2b = jax.random.split(key, 4)

    bound1 = 1.0 / float(input_dim) ** 0.5
    w1 = jnp.zeros((input_dim, p_hid), jnp.float32).at[:, :hidden_dim].set(
        jax.random.uniform(k1w, (input_dim, hidden_dim), jnp.float32, -bound1, bound1))
    b1 = jnp.zeros((1, p_hid), jnp.float32).at[:, :hidden_dim].set(
        jax.random.uniform(k1b, (1, hidden_dim), jnp.float32, -bound1, bound1))

    bound2 = 1.0 / float(hidden_dim) ** 0.5
    w2 = jnp.zeros((p_hid, p_out), jnp.float32).at[:hidden_dim, :output_dim].set(
        jax.random.uniform(k2w, (hidden_dim, output_dim), jnp.float32, -bound2, bound2))
    # Padded logit columns get a huge negative bias so the kernel needs no mask.
    b2 = jnp.full((1, p_out), _NEG_BIG, jnp.float32).at[:, :output_dim].set(
        jax.random.uniform(k2b, (1, output_dim), jnp.float32, -bound2, bound2))

    return dict(w1=w1.astype(jnp.bfloat16), b1=b1,
                w2=w2.astype(jnp.bfloat16), b2=b2,
                input_dim=input_dim, hidden_dim=hidden_dim, output_dim=output_dim)


def gumbel_mlp(x, params, seed, tau=1.0, hard=False, block_b=512,
               return_logits=False):
    """Forward pass of GumbelMLP. Returns y (bf16), plus f32 logits if
    return_logits=True (test/debug only)."""
    w1, b1, w2, b2 = params["w1"], params["b1"], params["w2"], params["b2"]
    out_dim = params["output_dim"]
    d_in, p_hid = w1.shape
    p_out = w2.shape[1]

    B = x.shape[0]
    # Batch tile: big (>=128 row tiles amortize the ~0.35us/step overhead) but
    # capped at ceil(B/2) rounded to 16 so v7x's 2 TCs both get work.
    tb = min(block_b, _round_up(max((B + 1) // 2, 8), 16))
    Bp = _round_up(B, tb)
    n_tiles = Bp // tb

    xb = x.astype(jnp.bfloat16)
    if Bp != B:
        xb = jnp.zeros((Bp, d_in), jnp.bfloat16).at[:B].set(xb)

    # Gumbel(0,1) noise drawn on the host side of the kernel (deterministic per
    # seed); bf16 transport halves its HBM traffic.
    g = jax.random.gumbel(jax.random.PRNGKey(seed), (Bp, p_out),
                          jnp.float32).astype(jnp.bfloat16)

    kernel = functools.partial(_gumbel_mlp_kernel,
                               inv_tau=1.0 / float(tau), hard=bool(hard))

    in_specs = [
        pl.BlockSpec((tb, d_in), lambda i: (i, 0)),      # x tile streams
        pl.BlockSpec((d_in, p_hid), lambda i: (0, 0)),   # weights resident
        pl.BlockSpec((1, p_hid), lambda i: (0, 0)),
        pl.BlockSpec((p_hid, p_out), lambda i: (0, 0)),
        pl.BlockSpec((1, p_out), lambda i: (0, 0)),
        pl.BlockSpec((tb, p_out), lambda i: (i, 0)),     # noise tile streams
    ]
    out_shape = [jax.ShapeDtypeStruct((Bp, p_out), jnp.bfloat16)]
    out_specs = [pl.BlockSpec((tb, p_out), lambda i: (i, 0))]
    if return_logits:
        out_shape.append(jax.ShapeDtypeStruct((Bp, p_out), jnp.float32))
        out_specs.append(pl.BlockSpec((tb, p_out), lambda i: (i, 0)))

    outs = pl.pallas_call(
        kernel,
        grid=(n_tiles,),
        in_specs=in_specs,
        out_specs=out_specs,
        out_shape=out_shape,
        compiler_params=pltpu.CompilerParams(
            dimension_semantics=("parallel",)),   # 2x on v7x, no-op on v5e/v6e
    )(xb, w1, b1, w2, b2, g)

    y = outs[0][:B, :out_dim]
    if return_logits:
        return y, outs[1][:B, :out_dim]
    return y


def reference_logits(x, params):
    """Pure-JAX reference for the deterministic (matmul/bias/relu) path."""
    h = jnp.maximum(
        jnp.dot(x.astype(jnp.bfloat16), params["w1"],
                preferred_element_type=jnp.float32) + params["b1"], 0.0)
    logits = jnp.dot(h.astype(jnp.bfloat16), params["w2"],
                     preferred_element_type=jnp.float32) + params["b2"]
    return logits[:, :params["output_dim"]]


if __name__ == "__main__":
    B, input_dim, hidden_dim, output_dim = 256, 32, 64, 16
    tau = 0.7

    key = jax.random.PRNGKey(0)
    kx, kp = jax.random.split(key)
    x = jax.random.normal(kx, (B, input_dim), jnp.float32)
    params = init_params(kp, input_dim, hidden_dim, output_dim)

    y, logits = gumbel_mlp(x, params, seed=1234, tau=tau, hard=False,
                           return_logits=True)
    y = jax.block_until_ready(y)

    # 1) deterministic fc1->relu->fc2 path matches pure-JAX reference.
    ref_l = reference_logits(x, params)
    assert logits.shape == (B, output_dim)
    assert jnp.allclose(logits, ref_l, atol=2e-3, rtol=2e-3)

    # 2) soft Gumbel-softmax output is a valid per-row distribution.
    assert y.shape == (B, output_dim)
    assert bool(jnp.all(jnp.isfinite(y.astype(jnp.float32))))
    assert bool(jnp.all(y >= 0.0)) and bool(jnp.all(y <= 1.0))
    assert jnp.allclose(jnp.sum(y.astype(jnp.float32), axis=-1), 1.0, atol=1e-2)

    # 3) same seed -> identical sample; different seed -> different sample.
    y2 = gumbel_mlp(x, params, seed=1234, tau=tau, hard=False)
    assert bool(jnp.all(y == y2))
    y3 = gumbel_mlp(x, params, seed=4321, tau=tau, hard=False)
    assert not bool(jnp.all(y == y3))

    # 4) hard mode -> exact one-hot rows.
    yh = gumbel_mlp(x, params, seed=1234, tau=tau, hard=True)
    yh = jax.block_until_ready(yh)
    assert bool(jnp.all((yh == 0.0) | (yh == 1.0)))
    assert jnp.allclose(jnp.sum(yh.astype(jnp.float32), axis=-1), 1.0)

    print("KERNEL_OK")
</pallas_src>

<mosaic_0001>
module attributes {stable_mosaic.version = 11 : i64} {
  func.func @_gumbel_mlp_kernel(%arg0: i32, %arg1: memref<128x32xbf16, #tpu.memory_space<vmem>>, %arg2: memref<32x128xbf16, #tpu.memory_space<vmem>>, %arg3: memref<1x128xf32, #tpu.memory_space<vmem>>, %arg4: memref<128x128xbf16, #tpu.memory_space<vmem>>, %arg5: memref<1x128xf32, #tpu.memory_space<vmem>>, %arg6: memref<128x128xbf16, #tpu.memory_space<vmem>>, %arg7: memref<128x128xbf16, #tpu.memory_space<vmem>>, %arg8: memref<128x128xf32, #tpu.memory_space<vmem>>) attributes {dimension_semantics = [#tpu.dimension_semantics<parallel>], iteration_bounds = array<i64: 2>, scalar_prefetch = 0 : i64, scratch_operands = 0 : i64, tpu.core_type = #tpu.core_type<tc>, window_params = [{transform_indices = @transform_0, window_bounds = array<i64: 128, 32>}, {pipeline_mode = #tpu.pipeline_mode<synchronous>, transform_indices = @transform_1, window_bounds = array<i64: 32, 128>}, {pipeline_mode = #tpu.pipeline_mode<synchronous>, transform_indices = @transform_2, window_bounds = array<i64: 1, 128>}, {pipeline_mode = #tpu.pipeline_mode<synchronous>, transform_indices = @transform_3, window_bounds = array<i64: 128, 128>}, {pipeline_mode = #tpu.pipeline_mode<synchronous>, transform_indices = @transform_4, window_bounds = array<i64: 1, 128>}, {transform_indices = @transform_5, window_bounds = array<i64: 128, 128>}, {transform_indices = @transform_6, window_bounds = array<i64: 128, 128>}, {transform_indices = @transform_7, window_bounds = array<i64: 128, 128>}]} {
    %c0 = arith.constant 0 : index
    %c0_0 = arith.constant 0 : index
    %0 = vector.load %arg1[%c0, %c0_0] : memref<128x32xbf16, #tpu.memory_space<vmem>>, vector<128x32xbf16>
    %c0_1 = arith.constant 0 : index
    %c0_2 = arith.constant 0 : index
    %1 = vector.load %arg2[%c0_1, %c0_2] : memref<32x128xbf16, #tpu.memory_space<vmem>>, vector<32x128xbf16>
    %cst = arith.constant dense<0.000000e+00> : vector<128x128xf32>
    %2 = tpu.matmul %0, %1, %cst {dimension_numbers = #tpu.dot_dimension_numbers<[1], [0], [0], [1], [0, 0, 1, 1], [], []>} : vector<128x32xbf16>, vector<32x128xbf16>, vector<128x128xf32> -> vector<128x128xf32>
    %c0_3 = arith.constant 0 : index
    %c0_4 = arith.constant 0 : index
    %3 = vector.load %arg3[%c0_3, %c0_4] : memref<1x128xf32, #tpu.memory_space<vmem>>, vector<1x128xf32>
    %4 = vector.broadcast %3 : vector<1x128xf32> to vector<128x128xf32>
    %5 = arith.addf %2, %4 : vector<128x128xf32>
    %cst_5 = arith.constant 0.000000e+00 : f32
    %6 = vector.broadcast %cst_5 : f32 to vector<128x128xf32>
    %7 = arith.maximumf %5, %6 : vector<128x128xf32>
    %8 = arith.truncf %7 : vector<128x128xf32> to vector<128x128xbf16>
    %c0_6 = arith.constant 0 : index
    %c0_7 = arith.constant 0 : index
    %9 = vector.load %arg4[%c0_6, %c0_7] : memref<128x128xbf16, #tpu.memory_space<vmem>>, vector<128x128xbf16>
    %cst_8 = arith.constant dense<0.000000e+00> : vector<128x128xf32>
    %10 = tpu.matmul %8, %9, %cst_8 {dimension_numbers = #tpu.dot_dimension_numbers<[1], [0], [0], [1], [0, 0, 1, 1], [], []>} : vector<128x128xbf16>, vector<128x128xbf16>, vector<128x128xf32> -> vector<128x128xf32>
    %c0_9 = arith.constant 0 : index
    %c0_10 = arith.constant 0 : index
    %11 = vector.load %arg5[%c0_9, %c0_10] : memref<1x128xf32, #tpu.memory_space<vmem>>, vector<1x128xf32>
    %12 = vector.broadcast %11 : vector<1x128xf32> to vector<128x128xf32>
    %13 = arith.addf %10, %12 : vector<128x128xf32>
    %c0_11 = arith.constant 0 : index
    %c0_12 = arith.constant 0 : index
    %14 = vector.load %arg8[%c0_11, %c0_12] : memref<128x128xf32, #tpu.memory_space<vmem>>, vector<128x128xf32>
    tpu.vector_store %arg8[%c0_11, %c0_12], %13 {strides = array<i32>} : memref<128x128xf32, #tpu.memory_space<vmem>>, vector<128x128xf32>,
    %c0_13 = arith.constant 0 : index
    %c0_14 = arith.constant 0 : index
    %15 = vector.load %arg6[%c0_13, %c0_14] : memref<128x128xbf16, #tpu.memory_space<vmem>>, vector<128x128xbf16>
    %16 = arith.extf %15 : vector<128x128xbf16> to vector<128x128xf32>
    %17 = arith.addf %13, %16 : vector<128x128xf32>
    %cst_15 = arith.constant 1.42857146 : f32
    %18 = vector.broadcast %cst_15 : f32 to vector<128x128xf32>
    %19 = arith.mulf %17, %18 : vector<128x128xf32>
    %cst_16 = arith.constant dense<0xFF800000> : vector<128xf32>
    %20 = vector.multi_reduction <maximumf>, %19, %cst_16 [1] : vector<128x128xf32> to vector<128xf32>
    %21 = vector.shape_cast %20 : vector<128xf32> to vector<128x1xf32>
    %22 = vector.broadcast %21 : vector<128x1xf32> to vector<128x128xf32>
    %23 = arith.subf %19, %22 : vector<128x128xf32>
    %24 = math.exp %23 : vector<128x128xf32>
    %cst_17 = arith.constant dense<0.000000e+00> : vector<128xf32>
    %25 = vector.multi_reduction <add>, %24, %cst_17 [1] : vector<128x128xf32> to vector<128xf32>
    %26 = vector.shape_cast %25 : vector<128xf32> to vector<128x1xf32>
    %27 = vector.broadcast %26 : vector<128x1xf32> to vector<128x128xf32>
    %28 = arith.divf %24, %27 : vector<128x128xf32>
    %29 = arith.truncf %28 : vector<128x128xf32> to vector<128x128xbf16>
    %c0_18 = arith.constant 0 : index
    %c0_19 = arith.constant 0 : index
    %30 = vector.load %arg7[%c0_18, %c0_19] : memref<128x128xbf16, #tpu.memory_space<vmem>>, vector<128x128xbf16>
    tpu.vector_store %arg7[%c0_18, %c0_19], %29 {strides = array<i32>} : memref<128x128xbf16, #tpu.memory_space<vmem>>, vector<128x128xbf16>,
    return
  }
  func.func @transform_0(%arg0: i32) -> (i32, i32) {
    %c0_i32 = arith.constant 0 : i32
    %c0_i32_0 = arith.constant 0 : i32
    return %arg0, %c0_i32 : i32, i32
  }
  func.func @transform_1(%arg0: i32) -> (i32, i32) {
    %c0_i32 = arith.constant 0 : i32
    %c0_i32_0 = arith.constant 0 : i32
    %c0_i32_1 = arith.constant 0 : i32
    return %c0_i32, %c0_i32_0 : i32, i32
  }
  func.func @transform_2(%arg0: i32) -> (i32, i32) {
    %c0_i32 = arith.constant 0 : i32
    %c0_i32_0 = arith.constant 0 : i32
    %c0_i32_1 = arith.constant 0 : i32
    return %c0_i32, %c0_i32_0 : i32, i32
  }
  func.func @transform_3(%arg0: i32) -> (i32, i32) {
    %c0_i32 = arith.constant 0 : i32
    %c0_i32_0 = arith.constant 0 : i32
    %c0_i32_1 = arith.constant 0 : i32
    return %c0_i32, %c0_i32_0 : i32, i32
  }
  func.func @transform_4(%arg0: i32) -> (i32, i32) {
    %c0_i32 = arith.constant 0 : i32
    %c0_i32_0 = arith.constant 0 : i32
    %c0_i32_1 = arith.constant 0 : i32
    return %c0_i32, %c0_i32_0 : i32, i32
  }
  func.func @transform_5(%arg0: i32) -> (i32, i32) {
    %c0_i32 = arith.constant 0 : i32
    %c0_i32_0 = arith.constant 0 : i32
    return %arg0, %c0_i32 : i32, i32
  }
  func.func @transform_6(%arg0: i32) -> (i32, i32) {
    %c0_i32 = arith.constant 0 : i32
    %c0_i32_0 = arith.constant 0 : i32
    return %arg0, %c0_i32 : i32, i32
  }
  func.func @transform_7(%arg0: i32) -> (i32, i32) {
    %c0_i32 = arith.constant 0 : i32
    %c0_i32_0 = arith.constant 0 : i32
    return %arg0, %c0_i32 : i32, i32
  }
}

</mosaic_0001>

<llo_original>
// kernel: tpu_custom_call.1
$region0: #{tpu_custom_call.1}
  #allocation0 [shape = 'u32[]', space=smem, size = 0x4, offset = 0x4, fixed_abs, tag = 'smem constant byte address 0x4 - core index']
  #allocation1 [shape = 'u32[144,128]{1,0:T(1,128)}', space=vmem, size = 0x12000, scoped, tag = 'internal scratch']
  %s0 = inlined_call_operand.vmem [shape: bf16[256,32], index: 0, kind: input, shape index: {}]
  %s1 = inlined_call_operand.vmem [shape: bf16[32,128], index: 1, kind: input, shape index: {}]
  %s2 = inlined_call_operand.vmem [shape: f32[1,128], index: 2, kind: input, shape index: {}]
  %s3 = inlined_call_operand.hbm [shape: bf16[128,128], index: 3, kind: input, shape index: {}]
  %s4 = inlined_call_operand.vmem [shape: f32[1,128], index: 4, kind: input, shape index: {}]
  %s5 = inlined_call_operand.vmem [shape: bf16[256,128], index: 5, kind: input, shape index: {}]
  %s6 = inlined_call_operand.hbm [shape: bf16[256,128], index: 6, kind: output, shape index: {0}]
  %s7 = inlined_call_operand.hbm [shape: f32[256,128], index: 7, kind: output, shape index: {1}]
  %8 = xla_tuple %s6, %s7
  %s9 = sld [smem:[#allocation0]]
  $region69: #{tpu_custom_call.1} parent=0
    _
  %s11 = ssub.s32 1, %s9
  %s12 = scalar_select 0, %s11, %s9
  $region1: #{tpu_custom_call.1} parent=0
    #allocation2 [shape = 'u8[32768]{0}', space=vmem, size = 0x8000, scoped, tag = 'input window, operand 3, single buffered']
    #allocation3 [shape = 's32[2]{0}', space=sflag, size = 0x8, scoped, tag = 'scoped memory for tpu_custom_call.1']
    #allocation4 [shape = 's32[2]{0}', space=sflag, size = 0x8, scoped, tag = 'scoped memory for tpu_custom_call.1']
    #allocation5 [shape = 'u8[65536]{0}', space=vmem, size = 0x10000, scoped, tag = 'output window, operand 0']
    #allocation6 [shape = 'u8[131072]{0}', space=vmem, size = 0x20000, scoped, tag = 'output window, operand 1']
    #allocation7 [shape = 's32[2]{0}', space=sflag, size = 0x8, scoped, tag = 'scoped memory for tpu_custom_call.1']
    %13 = vsyncpa [#allocation3], 0
    %14 = vsyncpa [#allocation4], 0
    %s15 = scalar_lea.sflag [#allocation4], 1
    %16 = vsyncpa %s15, 0
    %17 = vsyncpa [#allocation7], 0
    %s18 = scalar_lea.sflag [#allocation7], 1
    %19 = vsyncpa %s18, 0
    loop: start=0, step=1, limit=4
    $region2: #{tpu_custom_call.1} parent=1 // loop_pre_header
      _
    $region3: #{tpu_custom_call.1} parent=1 // loop_header
      %s21 = sphi 0, %s25
      %p22 = scmp.ge.s32.totalorder %s21, 4
      %s31 = sphi 0, %s33
      %s34 = sphi 0, %s31
      %s35 = sphi 0, %s34
      %s51 = sphi 0, %s35
      %s55 = sphi 0, %s55
      %s57 = sphi 0, %s55
      %s58 = sphi 0, %s57
      %s72 = sphi 0, %s58
      %s76 = sphi 0, %s76
      %s78 = sphi 0, %s76
      %s79 = sphi 0, %s78
      %s93 = sphi 0, %s79
      %s97 = sphi 0, %s97
      %s99 = sphi 0, %s97
      %s100 = sphi 0, %s99
      %s114 = sphi 0, %s100
      %s118 = sphi 0, %s118
      %s120 = sphi 0, %s118
      %s121 = sphi 0, %s120
      %s135 = sphi 0, %s121
      %s141 = sphi 0, %s143
      %s144 = sphi 0, %s141
      %s145 = sphi 0, %s144
      %s161 = sphi 0, %s145
      %s167 = sphi 0, %s169
      %s170 = sphi 0, %s167
      %s171 = sphi 0, %s170
      %s187 = sphi 0, %s171
      %s193 = sphi 0, %s195
      %s196 = sphi 0, %s193
      %s197 = sphi 0, %s196
      %s213 = sphi 0, %s197
    $region4: #{tpu_custom_call.1} parent=1 // loop_header_branch
      %24 = sbr.rel (%p22) target = $region8
    $region5: #{tpu_custom_call.1} parent=1 // loop_body
      %s26 = ssub.s32 %s21, 1
      %s27 = ssub.s32 %s21, 2
      %s28 = sadd.s32 %s21, 1
      %s29 = ssub.s32 %s21, %s28
      %p30 = scmp.eq.s32.totalorder %s29, 0
      %s32 = sadd.s32 %s31, 1
      %s33 = scalar_select %p30, %s31, %s32
      %p36 = pneg %p30
      %p37 = scmp.eq.s32.totalorder %s21, 1
      %p38 = por %p36, %p37
      %p39 = scmp.ne.s32.totalorder %s31, %s34
      %p40 = scmp.eq.s32.totalorder %s21, 0
      %p41 = por %p39, %p40
      %p42 = scmp.ne.s32.totalorder %s31, %s34
      %p43 = scmp.eq.s32.totalorder %s26, 1
      %p44 = por %p42, %p43
      %p45 = scmp.ne.s32.totalorder %s34, %s35
      %p46 = scmp.eq.s32.totalorder %s26, 0
      %p47 = por %p45, %p46
      %p48 = scmp.ne.s32.totalorder %s34, %s35
      %p49 = scmp.eq.s32.totalorder %s27, 1
      %p50 = por %p48, %p49
      %p52 = scmp.ne.s32.totalorder %s35, %s51
      %p53 = scmp.eq.s32.totalorder %s27, 0
      %p54 = por %p52, %p53
      %s56 = sadd.s32 %s55, 1
      %p59 = scmp.eq.s32.totalorder %s21, 1
      %p60 = scmp.ne.s32.totalorder %s55, %s57
      %p61 = scmp.eq.s32.totalorder %s21, 0
      %p62 = por %p60, %p61
      %p63 = scmp.ne.s32.totalorder %s55, %s57
      %p64 = scmp.eq.s32.totalorder %s26, 1
      %p65 = por %p63, %p64
      %p66 = scmp.ne.s32.totalorder %s57, %s58
      %p67 = scmp.eq.s32.totalorder %s26, 0
      %p68 = por %p66, %p67
      %p69 = scmp.ne.s32.totalorder %s57, %s58
      %p70 = scmp.eq.s32.totalorder %s27, 1
      %p71 = por %p69, %p70
      %p73 = scmp.ne.s32.totalorder %s58, %s72
      %p74 = scmp.eq.s32.totalorder %s27, 0
      %p75 = por %p73, %p74
      %s77 = sadd.s32 %s76, 1
      %p80 = scmp.eq.s32.totalorder %s21, 1
      %p81 = scmp.ne.s32.totalorder %s76, %s78
      %p82 = scmp.eq.s32.totalorder %s21, 0
      %p83 = por %p81, %p82
      %p84 = scmp.ne.s32.totalorder %s76, %s78
      %p85 = scmp.eq.s32.totalorder %s26, 1
      %p86 = por %p84, %p85
      %p87 = scmp.ne.s32.totalorder %s78, %s79
      %p88 = scmp.eq.s32.totalorder %s26, 0
      %p89 = por %p87, %p88
      %p90 = scmp.ne.s32.totalorder %s78, %s79
      %p91 = scmp.eq.s32.totalorder %s27, 1
      %p92 = por %p90, %p91
      %p94 = scmp.ne.s32.totalorder %s79, %s93
      %p95 = scmp.eq.s32.totalorder %s27, 0
      %p96 = por %p94, %p95
      %s98 = sadd.s32 %s97, 1
      %p101 = scmp.eq.s32.totalorder %s21, 1
      %p102 = scmp.ne.s32.totalorder %s97, %s99
      %p103 = scmp.eq.s32.totalorder %s21, 0
      %p104 = por %p102, %p103
      %p105 = scmp.ne.s32.totalorder %s97, %s99
      %p106 = scmp.eq.s32.totalorder %s26, 1
      %p107 = por %p105, %p106
      %p108 = scmp.ne.s32.totalorder %s99, %s100
      %p109 = scmp.eq.s32.totalorder %s26, 0
      %p110 = por %p108, %p109
      %p111 = scmp.ne.s32.totalorder %s99, %s100
      %p112 = scmp.eq.s32.totalorder %s27, 1
      %p113 = por %p111, %p112
      %p115 = scmp.ne.s32.totalorder %s100, %s114
      %p116 = scmp.eq.s32.totalorder %s27, 0
      %p117 = por %p115, %p116
      %s119 = sadd.s32 %s118, 1
      %p122 = scmp.eq.s32.totalorder %s21, 1
      %p123 = scmp.ne.s32.totalorder %s118, %s120
      %p124 = scmp.eq.s32.totalorder %s21, 0
      %p125 = por %p123, %p124
      %p126 = scmp.ne.s32.totalorder %s118, %s120
      %p127 = scmp.eq.s32.totalorder %s26, 1
      %p128 = por %p126, %p127
      %p129 = scmp.ne.s32.totalorder %s120, %s121
      %p130 = scmp.eq.s32.totalorder %s26, 0
      %p131 = por %p129, %p130
      %p132 = scmp.ne.s32.totalorder %s120, %s121
      %p133 = scmp.eq.s32.totalorder %s27, 1
      %p134 = por %p132, %p133
      %p136 = scmp.ne.s32.totalorder %s121, %s135
      %p137 = scmp.eq.s32.totalorder %s27, 0
      %p138 = por %p136, %p137
      %s139 = ssub.s32 %s21, %s28
      %p140 = scmp.eq.s32.totalorder %s139, 0
      %s142 = sadd.s32 %s141, 1
      %s143 = scalar_select %p140, %s141, %s142
      %p146 = pneg %p140
      %p147 = scmp.eq.s32.totalorder %s21, 1
      %p148 = por %p146, %p147
      %p149 = scmp.ne.s32.totalorder %s141, %s144
      %p150 = scmp.eq.s32.totalorder %s21, 0
      %p151 = por %p149, %p150
      %p152 = scmp.ne.s32.totalorder %s141, %s144
      %p153 = scmp.eq.s32.totalorder %s26, 1
      %p154 = por %p152, %p153
      %p155 = scmp.ne.s32.totalorder %s144, %s145
      %p156 = scmp.eq.s32.totalorder %s26, 0
      %p157 = por %p155, %p156
      %p158 = scmp.ne.s32.totalorder %s144, %s145
      %p159 = scmp.eq.s32.totalorder %s27, 1
      %p160 = por %p158, %p159
      %p162 = scmp.ne.s32.totalorder %s145, %s161
      %p163 = scmp.eq.s32.totalorder %s27, 0
      %p164 = por %p162, %p163
      %s165 = ssub.s32 %s21, %s28
      %p166 = scmp.eq.s32.totalorder %s165, 0
      %s168 = sadd.s32 %s167, 1
      %s169 = scalar_select %p166, %s167, %s168
      %p172 = pneg %p166
      %p173 = scmp.eq.s32.totalorder %s21, 1
      %p174 = por %p172, %p173
      %p175 = scmp.ne.s32.totalorder %s167, %s170
      %p176 = scmp.eq.s32.totalorder %s21, 0
      %p177 = por %p175, %p176
      %p178 = scmp.ne.s32.totalorder %s167, %s170
      %p179 = scmp.eq.s32.totalorder %s26, 1
      %p180 = por %p178, %p179
      %p181 = scmp.ne.s32.totalorder %s170, %s171
      %p182 = scmp.eq.s32.totalorder %s26, 0
      %p183 = por %p181, %p182
      %p184 = scmp.ne.s32.totalorder %s170, %s171
      %p185 = scmp.eq.s32.totalorder %s27, 1
      %p186 = por %p184, %p185
      %p188 = scmp.ne.s32.totalorder %s171, %s187
      %p189 = scmp.eq.s32.totalorder %s27, 0
      %p190 = por %p188, %p189
      %s191 = ssub.s32 %s21, %s28
      %p192 = scmp.eq.s32.totalorder %s191, 0
      %s194 = sadd.s32 %s193, 1
      %s195 = scalar_select %p192, %s193, %s194
      %p198 = pneg %p192
      %p199 = scmp.eq.s32.totalorder %s21, 1
      %p200 = por %p198, %p199
      %p201 = scmp.ne.s32.totalorder %s193, %s196
      %p202 = scmp.eq.s32.totalorder %s21, 0
      %p203 = por %p201, %p202
      %p204 = scmp.ne.s32.totalorder %s193, %s196
      %p205 = scmp.eq.s32.totalorder %s26, 1
      %p206 = por %p204, %p205
      %p207 = scmp.ne.s32.totalorder %s196, %s197
      %p208 = scmp.eq.s32.totalorder %s26, 0
      %p209 = por %p207, %p208
      %p210 = scmp.ne.s32.totalorder %s196, %s197
      %p211 = scmp.eq.s32.totalorder %s27, 1
      %p212 = por %p210, %p211
      %p214 = scmp.ne.s32.totalorder %s197, %s213
      %p215 = scmp.eq.s32.totalorder %s27, 0
      %p216 = por %p214, %p215
      %p217 = scmp.le.s32.totalorder 1, %s21
      %p218 = scmp.lt.s32.totalorder %s21, 3
      %p219 = pnand %p217, %p218
      %p220 = pneg %p219
      // Predicated region
      $region9: #{tpu_custom_call.1} parent=5 // pred_check
        _
      $region10: #{tpu_custom_call.1} parent=5 // pred_check_branch
        %222 = sbr.rel (%p219) target = $region12
      $region11: #{tpu_custom_call.1} parent=5 // pred_region
        %s223 = ssub.s32 %s21, 1
        // Predicated region
        $region13: #{tpu_custom_call.1} parent=11 // pred_check
          %p224 = pneg %p68
        $region14: #{tpu_custom_call.1} parent=11 // pred_check_branch
          %226 = sbr.rel (%p224) target = $region16
        $region15: #{tpu_custom_call.1} parent=11 // pred_region
          _
        $region16: #{tpu_custom_call.1} parent=11 // pred_fallthru
          _
        // Predicated region
        $region17: #{tpu_custom_call.1} parent=11 // pred_check
          %p227 = pneg %p89
        $region18: #{tpu_custom_call.1} parent=11 // pred_check_branch
          %229 = sbr.rel (%p227) target = $region20
        $region19: #{tpu_custom_call.1} parent=11 // pred_region
          _
        $region20: #{tpu_custom_call.1} parent=11 // pred_fallthru
          _
        // Predicated region
        $region21: #{tpu_custom_call.1} parent=11 // pred_check
          %p230 = pneg %p110
        $region22: #{tpu_custom_call.1} parent=11 // pred_check_branch
          %232 = sbr.rel (%p230) target = $region24
        $region23: #{tpu_custom_call.1} parent=11 // pred_region
          %s234 = ssub.s32 1024, 1024
          %235 = vsyncadd [#allocation3], %s234
          %s236 = sshll.u32 [#allocation2], 4
          %s237 = int_to_ptr.vmem [resolvable:$true] %s236
          %242 = dma.hbm_to_vmem [thread:$0]  %s3, 1024, %s237, [#allocation3], 64, 64, 4
        $region24: #{tpu_custom_call.1} parent=11 // pred_fallthru
          _
        // Predicated region
        $region25: #{tpu_custom_call.1} parent=11 // pred_check
          %p243 = pneg %p131
        $region26: #{tpu_custom_call.1} parent=11 // pred_check_branch
          %245 = sbr.rel (%p243) target = $region28
        $region27: #{tpu_custom_call.1} parent=11 // pred_region
          _
        $region28: #{tpu_custom_call.1} parent=11 // pred_fallthru
          _
      $region12: #{tpu_custom_call.1} parent=5 // pred_fallthru
        _
      %p246 = scmp.lt.s32.totalorder %s21, 2
      // Predicated region
      $region29: #{tpu_custom_call.1} parent=5 // pred_check
        %p247 = pneg %p246
      $region30: #{tpu_custom_call.1} parent=5 // pred_check_branch
        %249 = sbr.rel (%p247) target = $region32
      $region31: #{tpu_custom_call.1} parent=5 // pred_region
        // Predicated region
        $region33: #{tpu_custom_call.1} parent=31 // pred_check
          %p250 = pneg %p41
        $region34: #{tpu_custom_call.1} parent=31 // pred_check_branch
          %252 = sbr.rel (%p250) target = $region36
        $region35: #{tpu_custom_call.1} parent=31 // pred_region
          %s253 = smul.u32 16, %s21
          %p254 = scmp.lt.s32.totalorder %s253, 31
          %s255 = scalar_select %p254, %s253, 31
          %s256 = smul.addr %s255, 4
          %s257 = scalar_lea.vmem %s0, %s256
          %s258 = smul.u32 16, %s21
        $region36: #{tpu_custom_call.1} parent=31 // pred_fallthru
          _
        // Predicated region
        $region37: #{tpu_custom_call.1} parent=31 // pred_check
          %p259 = pneg %p151
        $region38: #{tpu_custom_call.1} parent=31 // pred_check_branch
          %261 = sbr.rel (%p259) target = $region40
        $region39: #{tpu_custom_call.1} parent=31 // pred_region
          %s262 = smul.u32 16, %s21
          %p263 = scmp.lt.s32.totalorder %s262, 31
          %s264 = scalar_select %p263, %s262, 31
          %s265 = smul.addr %s264, 4
          %s266 = scalar_lea.vmem %s5, %s265
          %s267 = smul.u32 16, %s21
        $region40: #{tpu_custom_call.1} parent=31 // pred_fallthru
          _
      $region32: #{tpu_custom_call.1} parent=5 // pred_fallthru
        _
      %p268 = scmp.le.s32.totalorder 1, %s21
      %p269 = scmp.lt.s32.totalorder %s21, 3
      %p270 = pnand %p268, %p269
      %p271 = pneg %p270
      // Predicated region
      $region41: #{tpu_custom_call.1} parent=5 // pred_check
        _
      $region42: #{tpu_custom_call.1} parent=5 // pred_check_branch
        %273 = sbr.rel (%p270) target = $region44
      $region43: #{tpu_custom_call.1} parent=5 // pred_region
        %s274 = ssub.s32 %s21, 1
        // Predicated region
        $region45: #{tpu_custom_call.1} parent=43 // pred_check
          %p275 = pneg %p110
        $region46: #{tpu_custom_call.1} parent=43 // pred_check_branch
          %277 = sbr.rel (%p275) target = $region48
        $region47: #{tpu_custom_call.1} parent=43 // pred_region
          %278 = dma.done [#allocation3], 1024
        $region48: #{tpu_custom_call.1} parent=43 // pred_fallthru
          _
        %s279 = smul.u32 16, %s26
        %p280 = scmp.lt.s32.totalorder %s279, 31
        %s281 = scalar_select %p280, %s279, 31
        %s282 = smul.addr %s281, 4
        %s283 = scalar_lea.vmem %s0, %s282
        %p284 = pneg %p47
        %p285 = pneg %p44
        %p286 = pneg %p68
        %p287 = pneg %p65
        %p288 = pneg %p89
        %p289 = pneg %p86
        %p290 = pneg %p110
        %p291 = pneg %p107
        %p292 = pneg %p131
        %p293 = pneg %p128
        %s294 = smul.u32 16, %s26
        %p295 = scmp.lt.s32.totalorder %s294, 31
        %s296 = scalar_select %p295, %s294, 31
        %s297 = smul.addr %s296, 4
        %s298 = scalar_lea.vmem %s5, %s297
        %p299 = pneg %p157
        %p300 = pneg %p154
        %p301 = pneg %p183
        %p302 = pneg %p180
        %s303 = sand.u32 %s170, 1
        %s304 = scalar_lea.sflag [#allocation4], %s303
        %s305 = sand.u32 %s170, 1
        %s306 = smul.addr %s305, 64
        %s307 = scalar_lea.vmem [#allocation5], %s306
        %p308 = pneg %p209
        %p309 = pneg %p206
        %s310 = sand.u32 %s196, 1
        %s311 = scalar_lea.sflag [#allocation7], %s310
        %s312 = sand.u32 %s196, 1
        %s313 = smul.addr %s312, 128
        %s314 = scalar_lea.vmem [#allocation6], %s313
        %s315 = smul.u32 16, %s26
        %p316 = scmp.lt.s32.totalorder %s315, 31
        %s317 = scalar_select %p316, %s315, 31
        %s318 = smul.addr %s317, 4
        %s319 = scalar_lea.vmem %s0, %s318
        %s320 = smul.u32 16, %s26
        %s321 = smul.u32 16, %s26
        %p322 = scmp.lt.s32.totalorder %s321, 31
        %s323 = scalar_select %p322, %s321, 31
        %s324 = smul.addr %s323, 4
        %s325 = scalar_lea.vmem %s5, %s324
        %s326 = smul.u32 16, %s26
        %s327 = smul.u32 16, %s26
        %s328 = smul.u32 16, %s26
        %v330 = vld [vmem:[%s319] sm:$0xf]
        %v331 = vld [vmem:[%s319 + $0x4] sm:$0xf]
        %v332 = vld [vmem:[%s319 + $0x8] sm:$0xf]
        %v333 = vld [vmem:[%s319 + $0xc] sm:$0xf]
        %v334 = vld [vmem:[%s319 + $0x10] sm:$0xf]
        %v335 = vld [vmem:[%s319 + $0x14] sm:$0xf]
        %v336 = vld [vmem:[%s319 + $0x18] sm:$0xf]
        %v337 = vld [vmem:[%s319 + $0x1c] sm:$0xf]
        %v338 = vld [vmem:[%s319 + $0x20] sm:$0xf]
        %v339 = vld [vmem:[%s319 + $0x24] sm:$0xf]
        %v340 = vld [vmem:[%s319 + $0x28] sm:$0xf]
        %v341 = vld [vmem:[%s319 + $0x2c] sm:$0xf]
        %v342 = vld [vmem:[%s319 + $0x30] sm:$0xf]
        %v343 = vld [vmem:[%s319 + $0x34] sm:$0xf]
        %v344 = vld [vmem:[%s319 + $0x38] sm:$0xf]
        %v345 = vld [vmem:[%s319 + $0x3c] sm:$0xf]
        %v346 = vld [vmem:[%s1] sm:$0xf]
        %v347 = vld [vmem:[%s1 + $0x4] sm:$0xf]
        %v348 = vld [vmem:[%s1 + $0x8] sm:$0xf]
        %v349 = vld [vmem:[%s1 + $0xc] sm:$0xf]
        %v350 = vld [vmem:[%s2] sm:$0x1]
        %v352 = vlaneseq
        %v353 = vshrl.u32 %v352, 7
        %v354 = vsub.s32 0, %v353
        %v355 = vrot.slane %v350, %v354
        %v373 = vunpack.c.l.b16 %v330
        %v374 = vunpack.c.l.b16 %v331
        %v375 = vunpack.c.l.b16 %v332
        %v376 = vunpack.c.l.b16 %v333
        %v377 = vunpack.c.l.b16 %v334
        %v378 = vunpack.c.l.b16 %v335
        %v379 = vunpack.c.l.b16 %v336
        %v380 = vunpack.c.l.b16 %v337
        %v381 = vunpack.c.l.b16 %v338
        %v382 = vunpack.c.l.b16 %v339
        %v383 = vunpack.c.l.b16 %v340
        %v384 = vunpack.c.l.b16 %v341
        %v385 = vunpack.c.l.b16 %v342
        %v386 = vunpack.c.l.b16 %v343
        %v387 = vunpack.c.l.b16 %v344
        %v388 = vunpack.c.l.b16 %v345
        %v389 = vpack.c.b16 %v374, %v373
        %v390 = vpack.c.b16 %v376, %v375
        %v391 = vpack.c.b16 %v378, %v377
        %v392 = vpack.c.b16 %v380, %v379
        %v393 = vpack.c.b16 %v382, %v381
        %v394 = vpack.c.b16 %v384, %v383
        %v395 = vpack.c.b16 %v386, %v385
        %v396 = vpack.c.b16 %v388, %v387
        %v401 = vunpack.c.l.b16 %v346
        %v402 = vunpack.c.l.b16 %v347
        %v403 = vunpack.c.l.b16 %v348
        %v404 = vunpack.c.l.b16 %v349
        %v405 = vpack.c.b16 %v402, %v401
        %v406 = vpack.c.b16 %v404, %v403
        %vm409 = vcmask 261120
        %v411 = vsel %vm409, %v389, 0
        %v414 = vsel %vm409, %v390, 0
        %v417 = vsel %vm409, %v391, 0
        %v420 = vsel %vm409, %v392, 0
        %v423 = vsel %vm409, %v393, 0
        %v426 = vsel %vm409, %v394, 0
        %v429 = vsel %vm409, %v395, 0
        %v432 = vsel %vm409, %v396, 0
        %434 = vmatprep.subr.bf16.mxu0 0
        %435 = vmatpush1.bf16.msra.mxu0 0
        %436 = vmatprep.subr.bf16.mxu0 0
        %437 = vmatpush1.bf16.msra.mxu0 0
        %438 = vmatprep.subr.bf16.mxu0 0
        %439 = vmatpush1.bf16.msra.mxu0 0
        %440 = vmatprep.subr.bf16.mxu0 0
        %441 = vmatpush1.bf16.msra.mxu0 0
        %442 = vmatprep.subr.bf16.mxu0 0
        %443 = vmatpush1.bf16.msra.mxu0 0
        %444 = vmatprep.subr.bf16.mxu0 0
        %445 = vmatpush1.bf16.msra.mxu0 0
        %446 = vmatprep.subr.bf16.mxu0 0
        %447 = vmatpush1.bf16.msra.mxu0 %v406
        %448 = vmatprep.subr.bf16.mxu0 0
        %449 = vmatpush1.bf16.msra.mxu0 %v405
        %450 = vmatprep.subr.bf16.mxu0 0
        %451 = vmatpush2.bf16.msra.mxu0 0
        %452 = vmatprep.subr.bf16.mxu0 0
        %453 = vmatpush2.bf16.msra.mxu0 0
        %454 = vmatprep.subr.bf16.mxu0 0
        %455 = vmatpush2.bf16.msra.mxu0 0
        %456 = vmatprep.subr.bf16.mxu0 0
        %457 = vmatpush2.bf16.msra.mxu0 0
        %458 = vmatprep.subr.bf16.mxu0 0
        %459 = vmatpush2.bf16.msra.mxu0 0
        %460 = vmatprep.subr.bf16.mxu0 0
        %461 = vmatpush2.bf16.msra.mxu0 0
        %462 = vmatprep.subr.bf16.mxu0 0
        %463 = vmatpush2.bf16.msra.mxu0 0
        %464 = vmatprep.subr.bf16.mxu0 0
        %465 = vmatpush2.bf16.msra.mxu0 0
        %466 = vmatprep.mubr.bf16.mxu0 0
        %467 = vmatmul.mubr.bf16.gmra.mxu0 %v411
        %v468 = vpop.f32.mrf.mxu0
        %v469 = vadd.f32 %v355, %v468
        %v470 = vpop.f32.mrf.mxu0
        %v471 = vpop.f32.mrf.mxu0
        %v472 = vadd.f32 %v355, %v471
        %v473 = vpop.f32.mrf.mxu0
        %474 = vmatprep.mubr.bf16.mxu0 0
        %475 = vmatmul.mubr.bf16.gmra.mxu0 %v414
        %v476 = vpop.f32.mrf.mxu0
        %v477 = vadd.f32 %v355, %v476
        %v478 = vpop.f32.mrf.mxu0
        %v479 = vpop.f32.mrf.mxu0
        %v480 = vadd.f32 %v355, %v479
        %v481 = vpop.f32.mrf.mxu0
        %482 = vmatprep.mubr.bf16.mxu0 0
        %483 = vmatmul.mubr.bf16.gmra.mxu0 %v417
        %v484 = vpop.f32.mrf.mxu0
        %v485 = vadd.f32 %v355, %v484
        %v486 = vpop.f32.mrf.mxu0
        %v487 = vpop.f32.mrf.mxu0
        %v488 = vadd.f32 %v355, %v487
        %v489 = vpop.f32.mrf.mxu0
        %490 = vmatprep.mubr.bf16.mxu0 0
        %491 = vmatmul.mubr.bf16.gmra.mxu0 %v420
        %v492 = vpop.f32.mrf.mxu0
        %v493 = vadd.f32 %v355, %v492
        %v494 = vpop.f32.mrf.mxu0
        %v495 = vpop.f32.mrf.mxu0
        %v496 = vadd.f32 %v355, %v495
        %v497 = vpop.f32.mrf.mxu0
        %498 = vmatprep.mubr.bf16.mxu0 0
        %499 = vmatmul.mubr.bf16.gmra.mxu0 %v423
        %v500 = vpop.f32.mrf.mxu0
        %v501 = vadd.f32 %v355, %v500
        %v502 = vpop.f32.mrf.mxu0
        %v503 = vpop.f32.mrf.mxu0
        %v504 = vadd.f32 %v355, %v503
        %v505 = vpop.f32.mrf.mxu0
        %506 = vmatprep.mubr.bf16.mxu0 0
        %507 = vmatmul.mubr.bf16.gmra.mxu0 %v426
        %v508 = vpop.f32.mrf.mxu0
        %v509 = vadd.f32 %v355, %v508
        %v510 = vpop.f32.mrf.mxu0
        %v511 = vpop.f32.mrf.mxu0
        %v512 = vadd.f32 %v355, %v511
        %v513 = vpop.f32.mrf.mxu0
        %514 = vmatprep.mubr.bf16.mxu0 0
        %515 = vmatmul.mubr.bf16.gmra.mxu0 %v429
        %v516 = vpop.f32.mrf.mxu0
        %v517 = vadd.f32 %v355, %v516
        %v518 = vpop.f32.mrf.mxu0
        %v519 = vpop.f32.mrf.mxu0
        %v520 = vadd.f32 %v355, %v519
        %v521 = vpop.f32.mrf.mxu0
        %522 = vmatprep.mubr.bf16.mxu0 0
        %523 = vmatmul.mubr.bf16.gmra.mxu0 %v432
        %v524 = vpop.f32.mrf.mxu0
        %v525 = vadd.f32 %v355, %v524
        %v526 = vpop.f32.mrf.mxu0
        %v527 = vpop.f32.mrf.mxu0
        %v528 = vadd.f32 %v355, %v527
        %v529 = vpop.f32.mrf.mxu0
        %530 = vdwg.mxu0
        %v531 = vmax.f32 %v469, 0.0
        %v532 = vmax.f32 %v472, 0.0
        %v533 = vmax.f32 %v477, 0.0
        %v534 = vmax.f32 %v480, 0.0
        %v535 = vmax.f32 %v485, 0.0
        %v536 = vmax.f32 %v488, 0.0
        %v537 = vmax.f32 %v493, 0.0
        %v538 = vmax.f32 %v496, 0.0
        %v539 = vmax.f32 %v501, 0.0
        %v540 = vmax.f32 %v504, 0.0
        %v541 = vmax.f32 %v509, 0.0
        %v542 = vmax.f32 %v512, 0.0
        %v543 = vmax.f32 %v517, 0.0
        %v544 = vmax.f32 %v520, 0.0
        %v545 = vmax.f32 %v525, 0.0
        %v546 = vmax.f32 %v528, 0.0
        %v547 = vpack.c.bf16 %v532, %v531
        %v548 = vpack.c.bf16 %v534, %v533
        %v549 = vpack.c.bf16 %v536, %v535
        %v550 = vpack.c.bf16 %v538, %v537
        %v551 = vpack.c.bf16 %v540, %v539
        %v552 = vpack.c.bf16 %v542, %v541
        %v553 = vpack.c.bf16 %v544, %v543
        %v554 = vpack.c.bf16 %v546, %v545
        %v555 = vld [vmem:[#allocation2] sm:$0xf]
        %v556 = vld [vmem:[#allocation2 + $0x4] sm:$0xf]
        %v557 = vld [vmem:[#allocation2 + $0x8] sm:$0xf]
        %v558 = vld [vmem:[#allocation2 + $0xc] sm:$0xf]
        %v559 = vld [vmem:[#allocation2 + $0x10] sm:$0xf]
        %v560 = vld [vmem:[#allocation2 + $0x14] sm:$0xf]
        %v561 = vld [vmem:[#allocation2 + $0x18] sm:$0xf]
        %v562 = vld [vmem:[#allocation2 + $0x1c] sm:$0xf]
        %v563 = vld [vmem:[#allocation2 + $0x20] sm:$0xf]
        %v564 = vld [vmem:[#allocation2 + $0x24] sm:$0xf]
        %v565 = vld [vmem:[#allocation2 + $0x28] sm:$0xf]
        %v566 = vld [vmem:[#allocation2 + $0x2c] sm:$0xf]
        %v567 = vld [vmem:[#allocation2 + $0x30] sm:$0xf]
        %v568 = vld [vmem:[#allocation2 + $0x34] sm:$0xf]
        %v569 = vld [vmem:[#allocation2 + $0x38] sm:$0xf]
        %v570 = vld [vmem:[#allocation2 + $0x3c] sm:$0xf]
        %v571 = vld [vmem:[%s4] sm:$0x1]
        %v573 = vlaneseq
        %v574 = vshrl.u32 %v573, 7
        %v575 = vsub.s32 0, %v574
        %v576 = vrot.slane %v571, %v575
        %v594 = vunpack.c.l.b16 %v555
        %v595 = vunpack.c.l.b16 %v556
        %v596 = vunpack.c.l.b16 %v557
        %v597 = vunpack.c.l.b16 %v558
        %v598 = vunpack.c.l.b16 %v559
        %v599 = vunpack.c.l.b16 %v560
        %v600 = vunpack.c.l.b16 %v561
        %v601 = vunpack.c.l.b16 %v562
        %v602 = vunpack.c.l.b16 %v563
        %v603 = vunpack.c.l.b16 %v564
        %v604 = vunpack.c.l.b16 %v565
        %v605 = vunpack.c.l.b16 %v566
        %v606 = vunpack.c.l.b16 %v567
        %v607 = vunpack.c.l.b16 %v568
        %v608 = vunpack.c.l.b16 %v569
        %v609 = vunpack.c.l.b16 %v570
        %v610 = vpack.c.b16 %v595, %v594
        %v611 = vpack.c.b16 %v597, %v596
        %v612 = vpack.c.b16 %v599, %v598
        %v613 = vpack.c.b16 %v601, %v600
        %v614 = vpack.c.b16 %v603, %v602
        %v615 = vpack.c.b16 %v605, %v604
        %v616 = vpack.c.b16 %v607, %v606
        %v617 = vpack.c.b16 %v609, %v608
        %626 = vmatprep.subr.bf16.mxu0 0
        %627 = vmatpush1.bf16.msra.mxu0 %v617
        %628 = vmatprep.subr.bf16.mxu0 0
        %629 = vmatpush1.bf16.msra.mxu0 %v616
        %630 = vmatprep.subr.bf16.mxu0 0
        %631 = vmatpush1.bf16.msra.mxu0 %v615
        %632 = vmatprep.subr.bf16.mxu0 0
        %633 = vmatpush1.bf16.msra.mxu0 %v614
        %634 = vmatprep.subr.bf16.mxu0 0
        %635 = vmatpush1.bf16.msra.mxu0 %v613
        %636 = vmatprep.subr.bf16.mxu0 0
        %637 = vmatpush1.bf16.msra.mxu0 %v612
        %638 = vmatprep.subr.bf16.mxu0 0
        %639 = vmatpush1.bf16.msra.mxu0 %v611
        %640 = vmatprep.subr.bf16.mxu0 0
        %641 = vmatpush1.bf16.msra.mxu0 %v610
        %642 = vmatprep.subr.bf16.mxu0 0
        %643 = vmatpush2.bf16.msra.mxu0 0
        %644 = vmatprep.subr.bf16.mxu0 0
        %645 = vmatpush2.bf16.msra.mxu0 0
        %646 = vmatprep.subr.bf16.mxu0 0
        %647 = vmatpush2.bf16.msra.mxu0 0
        %648 = vmatprep.subr.bf16.mxu0 0
        %649 = vmatpush2.bf16.msra.mxu0 0
        %650 = vmatprep.subr.bf16.mxu0 0
        %651 = vmatpush2.bf16.msra.mxu0 0
        %652 = vmatprep.subr.bf16.mxu0 0
        %653 = vmatpush2.bf16.msra.mxu0 0
        %654 = vmatprep.subr.bf16.mxu0 0
        %655 = vmatpush2.bf16.msra.mxu0 0
        %656 = vmatprep.subr.bf16.mxu0 0
        %657 = vmatpush2.bf16.msra.mxu0 0
        %658 = vmatprep.mubr.bf16.mxu0 0
        %659 = vmatmul.mubr.bf16.gmra.mxu0 %v547
        %v660 = vpop.f32.mrf.mxu0
        %v661 = vadd.f32 %v576, %v660
        %v662 = vpop.f32.mrf.mxu0
        %v663 = vpop.f32.mrf.mxu0
        %v664 = vadd.f32 %v576, %v663
        %v665 = vpop.f32.mrf.mxu0
        %666 = vmatprep.mubr.bf16.mxu0 0
        %667 = vmatmul.mubr.bf16.gmra.mxu0 %v548
        %v668 = vpop.f32.mrf.mxu0
        %v669 = vadd.f32 %v576, %v668
        %v670 = vpop.f32.mrf.mxu0
        %v671 = vpop.f32.mrf.mxu0
        %v672 = vadd.f32 %v576, %v671
        %v673 = vpop.f32.mrf.mxu0
        %674 = vmatprep.mubr.bf16.mxu0 0
        %675 = vmatmul.mubr.bf16.gmra.mxu0 %v549
        %v676 = vpop.f32.mrf.mxu0
        %v677 = vadd.f32 %v576, %v676
        %v678 = vpop.f32.mrf.mxu0
        %v679 = vpop.f32.mrf.mxu0
        %v680 = vadd.f32 %v576, %v679
        %v681 = vpop.f32.mrf.mxu0
        %682 = vmatprep.mubr.bf16.mxu0 0
        %683 = vmatmul.mubr.bf16.gmra.mxu0 %v550
        %v684 = vpop.f32.mrf.mxu0
        %v685 = vadd.f32 %v576, %v684
        %v686 = vpop.f32.mrf.mxu0
        %v687 = vpop.f32.mrf.mxu0
        %v688 = vadd.f32 %v576, %v687
        %v689 = vpop.f32.mrf.mxu0
        %690 = vmatprep.mubr.bf16.mxu0 0
        %691 = vmatmul.mubr.bf16.gmra.mxu0 %v551
        %v692 = vpop.f32.mrf.mxu0
        %v693 = vadd.f32 %v576, %v692
        %v694 = vpop.f32.mrf.mxu0
        %v695 = vpop.f32.mrf.mxu0
        %v696 = vadd.f32 %v576, %v695
        %v697 = vpop.f32.mrf.mxu0
        %698 = vmatprep.mubr.bf16.mxu0 0
        %699 = vmatmul.mubr.bf16.gmra.mxu0 %v552
        %v700 = vpop.f32.mrf.mxu0
        %v701 = vadd.f32 %v576, %v700
        %v702 = vpop.f32.mrf.mxu0
        %v703 = vpop.f32.mrf.mxu0
        %v704 = vadd.f32 %v576, %v703
        %v705 = vpop.f32.mrf.mxu0
        %706 = vmatprep.mubr.bf16.mxu0 0
        %707 = vmatmul.mubr.bf16.gmra.mxu0 %v553
        %v708 = vpop.f32.mrf.mxu0
        %v709 = vadd.f32 %v576, %v708
        %v710 = vpop.f32.mrf.mxu0
        %v711 = vpop.f32.mrf.mxu0
        %v712 = vadd.f32 %v576, %v711
        %v713 = vpop.f32.mrf.mxu0
        %714 = vmatprep.mubr.bf16.mxu0 0
        %715 = vmatmul.mubr.bf16.gmra.mxu0 %v554
        %v716 = vpop.f32.mrf.mxu0
        %v717 = vadd.f32 %v576, %v716
        %v718 = vpop.f32.mrf.mxu0
        %v719 = vpop.f32.mrf.mxu0
        %v720 = vadd.f32 %v576, %v719
        %v721 = vpop.f32.mrf.mxu0
        %722 = vdwg.mxu0
        %723 = vst [vmem:[%s314] sm:$0xff] %v661
        %724 = vst [vmem:[%s314 + $0x8] sm:$0xff] %v664
        %725 = vst [vmem:[%s314 + $0x10] sm:$0xff] %v669
        %726 = vst [vmem:[%s314 + $0x18] sm:$0xff] %v672
        %727 = vst [vmem:[%s314 + $0x20] sm:$0xff] %v677
        %728 = vst [vmem:[%s314 + $0x28] sm:$0xff] %v680
        %729 = vst [vmem:[%s314 + $0x30] sm:$0xff] %v685
        %730 = vst [vmem:[%s314 + $0x38] sm:$0xff] %v688
        %731 = vst [vmem:[%s314 + $0x40] sm:$0xff] %v693
        %732 = vst [vmem:[%s314 + $0x48] sm:$0xff] %v696
        %733 = vst [vmem:[%s314 + $0x50] sm:$0xff] %v701
        %734 = vst [vmem:[%s314 + $0x58] sm:$0xff] %v704
        %735 = vst [vmem:[%s314 + $0x60] sm:$0xff] %v709
        %736 = vst [vmem:[%s314 + $0x68] sm:$0xff] %v712
        %737 = vst [vmem:[%s314 + $0x70] sm:$0xff] %v717
        %738 = vst [vmem:[%s314 + $0x78] sm:$0xff] %v720
        %v739 = vld [vmem:[%s325] sm:$0xf]
        %v740 = vld [vmem:[%s325 + $0x4] sm:$0xf]
        %v741 = vld [vmem:[%s325 + $0x8] sm:$0xf]
        %v742 = vld [vmem:[%s325 + $0xc] sm:$0xf]
        %v743 = vld [vmem:[%s325 + $0x10] sm:$0xf]
        %v744 = vld [vmem:[%s325 + $0x14] sm:$0xf]
        %v745 = vld [vmem:[%s325 + $0x18] sm:$0xf]
        %v746 = vld [vmem:[%s325 + $0x1c] sm:$0xf]
        %v747 = vld [vmem:[%s325 + $0x20] sm:$0xf]
        %v748 = vld [vmem:[%s325 + $0x24] sm:$0xf]
        %v749 = vld [vmem:[%s325 + $0x28] sm:$0xf]
        %v750 = vld [vmem:[%s325 + $0x2c] sm:$0xf]
        %v751 = vld [vmem:[%s325 + $0x30] sm:$0xf]
        %v752 = vld [vmem:[%s325 + $0x34] sm:$0xf]
        %v753 = vld [vmem:[%s325 + $0x38] sm:$0xf]
        %v754 = vld [vmem:[%s325 + $0x3c] sm:$0xf]
        %v755 = vunpack.c.l.bf16 %v739
        %v756 = vunpack.c.l.bf16 %v740
        %v757 = vunpack.c.l.bf16 %v741
        %v758 = vunpack.c.l.bf16 %v742
        %v759 = vunpack.c.l.bf16 %v743
        %v760 = vunpack.c.l.bf16 %v744
        %v761 = vunpack.c.l.bf16 %v745
        %v762 = vunpack.c.l.bf16 %v746
        %v763 = vunpack.c.l.bf16 %v747
        %v764 = vunpack.c.l.bf16 %v748
        %v765 = vunpack.c.l.bf16 %v749
        %v766 = vunpack.c.l.bf16 %v750
        %v767 = vunpack.c.l.bf16 %v751
        %v768 = vunpack.c.l.bf16 %v752
        %v769 = vunpack.c.l.bf16 %v753
        %v770 = vunpack.c.l.bf16 %v754
        %v771 = vadd.f32 %v661, %v755
        %v772 = vadd.f32 %v664, %v756
        %v773 = vadd.f32 %v669, %v757
        %v774 = vadd.f32 %v672, %v758
        %v775 = vadd.f32 %v677, %v759
        %v776 = vadd.f32 %v680, %v760
        %v777 = vadd.f32 %v685, %v761
        %v778 = vadd.f32 %v688, %v762
        %v779 = vadd.f32 %v693, %v763
        %v780 = vadd.f32 %v696, %v764
        %v781 = vadd.f32 %v701, %v765
        %v782 = vadd.f32 %v704, %v766
        %v783 = vadd.f32 %v709, %v767
        %v784 = vadd.f32 %v712, %v768
        %v785 = vadd.f32 %v717, %v769
        %v786 = vadd.f32 %v720, %v770
        %v787 = vmul.f32 %v771, 1.4285715
        %v788 = vmul.f32 %v772, 1.4285715
        %v789 = vmul.f32 %v773, 1.4285715
        %v790 = vmul.f32 %v774, 1.4285715
        %v791 = vmul.f32 %v775, 1.4285715
        %v792 = vmul.f32 %v776, 1.4285715
        %v793 = vmul.f32 %v777, 1.4285715
        %v794 = vmul.f32 %v778, 1.4285715
        %v795 = vmul.f32 %v779, 1.4285715
        %v796 = vmul.f32 %v780, 1.4285715
        %v797 = vmul.f32 %v781, 1.4285715
        %v798 = vmul.f32 %v782, 1.4285715
        %v799 = vmul.f32 %v783, 1.4285715
        %v800 = vmul.f32 %v784, 1.4285715
        %v801 = vmul.f32 %v785, 1.4285715
        %v802 = vmul.f32 %v786, 1.4285715
        %803 = vmax.xlane.f32.xlu0 %v787
        %v804 = vpop.xlane.xlu0 %803
        %805 = vmax.xlane.f32.xlu0 %v788
        %v806 = vpop.xlane.xlu0 %805
        %807 = vmax.xlane.f32.xlu0 %v789
        %v808 = vpop.xlane.xlu0 %807
        %809 = vmax.xlane.f32.xlu0 %v790
        %v810 = vpop.xlane.xlu0 %809
        %811 = vmax.xlane.f32.xlu0 %v791
        %v812 = vpop.xlane.xlu0 %811
        %813 = vmax.xlane.f32.xlu0 %v792
        %v814 = vpop.xlane.xlu0 %813
        %815 = vmax.xlane.f32.xlu0 %v793
        %v816 = vpop.xlane.xlu0 %815
        %817 = vmax.xlane.f32.xlu0 %v794
        %v818 = vpop.xlane.xlu0 %817
        %819 = vmax.xlane.f32.xlu0 %v795
        %v820 = vpop.xlane.xlu0 %819
        %821 = vmax.xlane.f32.xlu0 %v796
        %v822 = vpop.xlane.xlu0 %821
        %823 = vmax.xlane.f32.xlu0 %v797
        %v824 = vpop.xlane.xlu0 %823
        %825 = vmax.xlane.f32.xlu0 %v798
        %v826 = vpop.xlane.xlu0 %825
        %827 = vmax.xlane.f32.xlu0 %v799
        %v828 = vpop.xlane.xlu0 %827
        %829 = vmax.xlane.f32.xlu0 %v800
        %v830 = vpop.xlane.xlu0 %829
        %831 = vmax.xlane.f32.xlu0 %v801
        %v832 = vpop.xlane.xlu0 %831
        %833 = vmax.xlane.f32.xlu0 %v802
        %v834 = vpop.xlane.xlu0 %833
        %v835 = vsub.f32 %v787, %v804
        %v836 = vsub.f32 %v788, %v806
        %v837 = vsub.f32 %v789, %v808
        %v838 = vsub.f32 %v790, %v810
        %v839 = vsub.f32 %v791, %v812
        %v840 = vsub.f32 %v792, %v814
        %v841 = vsub.f32 %v793, %v816
        %v842 = vsub.f32 %v794, %v818
        %v843 = vsub.f32 %v795, %v820
        %v844 = vsub.f32 %v796, %v822
        %v845 = vsub.f32 %v797, %v824
        %v846 = vsub.f32 %v798, %v826
        %v847 = vsub.f32 %v799, %v828
        %v848 = vsub.f32 %v800, %v830
        %v849 = vsub.f32 %v801, %v832
        %v850 = vsub.f32 %v802, %v834
        %v851 = vmul.f32 %v835, 1.442695
        %v852 = vpow.pop %v851
        %v853 = vmul.f32 %v836, 1.442695
        %v854 = vpow.pop %v853
        %v855 = vmul.f32 %v837, 1.442695
        %v856 = vpow.pop %v855
        %v857 = vmul.f32 %v838, 1.442695
        %v858 = vpow.pop %v857
        %v859 = vmul.f32 %v839, 1.442695
        %v860 = vpow.pop %v859
        %v861 = vmul.f32 %v840, 1.442695
        %v862 = vpow.pop %v861
        %v863 = vmul.f32 %v841, 1.442695
        %v864 = vpow.pop %v863
        %v865 = vmul.f32 %v842, 1.442695
        %v866 = vpow.pop %v865
        %v867 = vmul.f32 %v843, 1.442695
        %v868 = vpow.pop %v867
        %v869 = vmul.f32 %v844, 1.442695
        %v870 = vpow.pop %v869
        %v871 = vmul.f32 %v845, 1.442695
        %v872 = vpow.pop %v871
        %v873 = vmul.f32 %v846, 1.442695
        %v874 = vpow.pop %v873
        %v875 = vmul.f32 %v847, 1.442695
        %v876 = vpow.pop %v875
        %v877 = vmul.f32 %v848, 1.442695
        %v878 = vpow.pop %v877
        %v879 = vmul.f32 %v849, 1.442695
        %v880 = vpow.pop %v879
        %v881 = vmul.f32 %v850, 1.442695
        %v882 = vpow.pop %v881
        %883 = vadd.xlane.f32.xlu0 %v852
        %v884 = vpop.xlane.xlu0 %883
        %885 = vadd.xlane.f32.xlu0 %v854
        %v886 = vpop.xlane.xlu0 %885
        %887 = vadd.xlane.f32.xlu0 %v856
        %v888 = vpop.xlane.xlu0 %887
        %889 = vadd.xlane.f32.xlu0 %v858
        %v890 = vpop.xlane.xlu0 %889
        %891 = vadd.xlane.f32.xlu0 %v860
        %v892 = vpop.xlane.xlu0 %891
        %893 = vadd.xlane.f32.xlu0 %v862
        %v894 = vpop.xlane.xlu0 %893
        %895 = vadd.xlane.f32.xlu0 %v864
        %v896 = vpop.xlane.xlu0 %895
        %897 = vadd.xlane.f32.xlu0 %v866
        %v898 = vpop.xlane.xlu0 %897
        %899 = vadd.xlane.f32.xlu0 %v868
        %v900 = vpop.xlane.xlu0 %899
        %901 = vadd.xlane.f32.xlu0 %v870
        %v902 = vpop.xlane.xlu0 %901
        %903 = vadd.xlane.f32.xlu0 %v872
        %v904 = vpop.xlane.xlu0 %903
        %905 = vadd.xlane.f32.xlu0 %v874
        %v906 = vpop.xlane.xlu0 %905
        %907 = vadd.xlane.f32.xlu0 %v876
        %v908 = vpop.xlane.xlu0 %907
        %909 = vadd.xlane.f32.xlu0 %v878
        %v910 = vpop.xlane.xlu0 %909
        %911 = vadd.xlane.f32.xlu0 %v880
        %v912 = vpop.xlane.xlu0 %911
        %913 = vadd.xlane.f32.xlu0 %v882
        %v914 = vpop.xlane.xlu0 %913
        %v915 = vrcp.pop %v884
        %v916 = vmul.f32 %v852, %v915
        %v917 = vrcp.pop %v886
        %v918 = vmul.f32 %v854, %v917
        %v919 = vrcp.pop %v888
        %v920 = vmul.f32 %v856, %v919
        %v921 = vrcp.pop %v890
        %v922 = vmul.f32 %v858, %v921
        %v923 = vrcp.pop %v892
        %v924 = vmul.f32 %v860, %v923
        %v925 = vrcp.pop %v894
        %v926 = vmul.f32 %v862, %v925
        %v927 = vrcp.pop %v896
        %v928 = vmul.f32 %v864, %v927
        %v929 = vrcp.pop %v898
        %v930 = vmul.f32 %v866, %v929
        %v931 = vrcp.pop %v900
        %v932 = vmul.f32 %v868, %v931
        %v933 = vrcp.pop %v902
        %v934 = vmul.f32 %v870, %v933
        %v935 = vrcp.pop %v904
        %v936 = vmul.f32 %v872, %v935
        %v937 = vrcp.pop %v906
        %v938 = vmul.f32 %v874, %v937
        %v939 = vrcp.pop %v908
        %v940 = vmul.f32 %v876, %v939
        %v941 = vrcp.pop %v910
        %v942 = vmul.f32 %v878, %v941
        %v943 = vrcp.pop %v912
        %v944 = vmul.f32 %v880, %v943
        %v945 = vrcp.pop %v914
        %v946 = vmul.f32 %v882, %v945
        %v947 = vpack.c.bf16 %v918, %v916
        %v948 = vpack.c.bf16 %v922, %v920
        %v949 = vpack.c.bf16 %v926, %v924
        %v950 = vpack.c.bf16 %v930, %v928
        %v951 = vpack.c.bf16 %v934, %v932
        %v952 = vpack.c.bf16 %v938, %v936
        %v953 = vpack.c.bf16 %v942, %v940
        %v954 = vpack.c.bf16 %v946, %v944
        %v963 = vunpack.c.l.b16 %v947
        %v964 = vunpack.c.h.b16 %v947
        %v965 = vunpack.c.l.b16 %v948
        %v966 = vunpack.c.h.b16 %v948
        %v967 = vunpack.c.l.b16 %v949
        %v968 = vunpack.c.h.b16 %v949
        %v969 = vunpack.c.l.b16 %v950
        %v970 = vunpack.c.h.b16 %v950
        %v971 = vunpack.c.l.b16 %v951
        %v972 = vunpack.c.h.b16 %v951
        %v973 = vunpack.c.l.b16 %v952
        %v974 = vunpack.c.h.b16 %v952
        %v975 = vunpack.c.l.b16 %v953
        %v976 = vunpack.c.h.b16 %v953
        %v977 = vunpack.c.l.b16 %v954
        %v978 = vunpack.c.h.b16 %v954
        %v979 = vpack.c.b16 %v963, %v963
        %v980 = vpack.c.b16 %v964, %v964
        %v981 = vpack.c.b16 %v965, %v965
        %v982 = vpack.c.b16 %v966, %v966
        %v983 = vpack.c.b16 %v967, %v967
        %v984 = vpack.c.b16 %v968, %v968
        %v985 = vpack.c.b16 %v969, %v969
        %v986 = vpack.c.b16 %v970, %v970
        %v987 = vpack.c.b16 %v971, %v971
        %v988 = vpack.c.b16 %v972, %v972
        %v989 = vpack.c.b16 %v973, %v973
        %v990 = vpack.c.b16 %v974, %v974
        %v991 = vpack.c.b16 %v975, %v975
        %v992 = vpack.c.b16 %v976, %v976
        %v993 = vpack.c.b16 %v977, %v977
        %v994 = vpack.c.b16 %v978, %v978
        %1011 = vst [vmem:[%s307] sm:$0xf] %v979
        %1012 = vst [vmem:[%s307 + $0x4] sm:$0xf] %v980
        %1013 = vst [vmem:[%s307 + $0x8] sm:$0xf] %v981
        %1014 = vst [vmem:[%s307 + $0xc] sm:$0xf] %v982
        %1015 = vst [vmem:[%s307 + $0x10] sm:$0xf] %v983
        %1016 = vst [vmem:[%s307 + $0x14] sm:$0xf] %v984
        %1017 = vst [vmem:[%s307 + $0x18] sm:$0xf] %v985
        %1018 = vst [vmem:[%s307 + $0x1c] sm:$0xf] %v986
        %1019 = vst [vmem:[%s307 + $0x20] sm:$0xf] %v987
        %1020 = vst [vmem:[%s307 + $0x24] sm:$0xf] %v988
        %1021 = vst [vmem:[%s307 + $0x28] sm:$0xf] %v989
        %1022 = vst [vmem:[%s307 + $0x2c] sm:$0xf] %v990
        %1023 = vst [vmem:[%s307 + $0x30] sm:$0xf] %v991
        %1024 = vst [vmem:[%s307 + $0x34] sm:$0xf] %v992
        %1025 = vst [vmem:[%s307 + $0x38] sm:$0xf] %v993
        %1026 = vst [vmem:[%s307 + $0x3c] sm:$0xf] %v994
        %s1027 = sand.u32 %s170, 1
        %s1028 = scalar_lea.sflag [#allocation4], %s1027
        %s1029 = sand.u32 %s170, 1
        %s1030 = smul.addr %s1029, 64
        %s1031 = scalar_lea.vmem [#allocation5], %s1030
        %s1032 = sand.u32 %s196, 1
        %s1033 = scalar_lea.sflag [#allocation7], %s1032
        %s1034 = sand.u32 %s196, 1
        %s1035 = smul.addr %s1034, 128
        %s1036 = scalar_lea.vmem [#allocation6], %s1035
        // Predicated region
        $region49: #{tpu_custom_call.1} parent=43 // pred_check
          %p1037 = pneg %p180
        $region50: #{tpu_custom_call.1} parent=43 // pred_check_branch
          %1039 = sbr.rel (%p1037) target = $region52
        $region51: #{tpu_custom_call.1} parent=43 // pred_region
          %s1040 = smul.u32 16, %s26
          %s1042 = ssub.s32 1024, 1024
          %1043 = vsyncadd %s1028, %s1042
          %s1044 = smul.addr %s1040, 64
          %s1045 = scalar_lea.hbm %s6, %s1044
          %s1046 = sshll.u32 %s1031, 4
          %s1047 = int_to_ptr.vmem [resolvable:$true] %s1046
          %1052 = dma.vmem_to_hbm [thread:$0]  %s1047, 1024, %s1045, %s1028, 64, 64, 4
        $region52: #{tpu_custom_call.1} parent=43 // pred_fallthru
          _
        // Predicated region
        $region53: #{tpu_custom_call.1} parent=43 // pred_check
          %p1053 = pneg %p206
        $region54: #{tpu_custom_call.1} parent=43 // pred_check_branch
          %1055 = sbr.rel (%p1053) target = $region56
        $region55: #{tpu_custom_call.1} parent=43 // pred_region
          %s1056 = smul.u32 16, %s26
          %s1058 = ssub.s32 2048, 2048
          %1059 = vsyncadd %s1033, %s1058
          %s1060 = smul.addr %s1056, 128
          %s1061 = scalar_lea.hbm %s7, %s1060
          %s1062 = sshll.u32 %s1036, 4
          %s1063 = int_to_ptr.vmem [resolvable:$true] %s1062
          %1068 = dma.vmem_to_hbm [thread:$0]  %s1063, 2048, %s1061, %s1033, 128, 128, 8
        $region56: #{tpu_custom_call.1} parent=43 // pred_fallthru
          _
      $region44: #{tpu_custom_call.1} parent=5 // pred_fallthru
        _
      %p1069 = scmp.le.s32.totalorder 2, %s21
      // Predicated region
      $region57: #{tpu_custom_call.1} parent=5 // pred_check
        %p1070 = pneg %p1069
      $region58: #{tpu_custom_call.1} parent=5 // pred_check_branch
        %1072 = sbr.rel (%p1070) target = $region60
      $region59: #{tpu_custom_call.1} parent=5 // pred_region
        %s1073 = ssub.s32 %s21, 2
        // Predicated region
        $region61: #{tpu_custom_call.1} parent=59 // pred_check
          %p1074 = pneg %p186
        $region62: #{tpu_custom_call.1} parent=59 // pred_check_branch
          %1076 = sbr.rel (%p1074) target = $region64
        $region63: #{tpu_custom_call.1} parent=59 // pred_region
          %s1077 = sand.u32 %s171, 1
          %s1078 = scalar_lea.sflag [#allocation4], %s1077
          %s1079 = sand.u32 %s171, 1
          %s1080 = smul.addr %s1079, 64
          %s1081 = scalar_lea.vmem [#allocation5], %s1080
          %1082 = dma.done %s1078, 1024
        $region64: #{tpu_custom_call.1} parent=59 // pred_fallthru
          _
        // Predicated region
        $region65: #{tpu_custom_call.1} parent=59 // pred_check
          %p1083 = pneg %p212
        $region66: #{tpu_custom_call.1} parent=59 // pred_check_branch
          %1085 = sbr.rel (%p1083) target = $region68
        $region67: #{tpu_custom_call.1} parent=59 // pred_region
          %s1086 = sand.u32 %s197, 1
          %s1087 = scalar_lea.sflag [#allocation7], %s1086
          %s1088 = sand.u32 %s197, 1
          %s1089 = smul.addr %s1088, 128
          %s1090 = scalar_lea.vmem [#allocation6], %s1089
          %1091 = dma.done %s1087, 2048
        $region68: #{tpu_custom_call.1} parent=59 // pred_fallthru
          _
      $region60: #{tpu_custom_call.1} parent=5 // pred_fallthru
        _
    $region6: #{tpu_custom_call.1} parent=1 // loop_footer
      %s25 = sadd.s32 1, %s21
    $region7: #{tpu_custom_call.1} parent=1 // loop_footer_branch
      %20 = sbr.rel target = $region3
    $region8: #{tpu_custom_call.1} parent=1 // loop_exit
      _
    %1092 = vsyncpa [#allocation3], 1
    %s1093 = scalar_lea.sflag [#allocation3], 1
    %1094 = vsyncpa %s1093, 1
    %1095 = vsyncpa [#allocation4], 1
    %s1096 = scalar_lea.sflag [#allocation4], 1
    %1097 = vsyncpa %s1096, 1
    %1098 = vsyncpa [#allocation7], 1
    %s1099 = scalar_lea.sflag [#allocation7], 1
    %1100 = vsyncpa %s1099, 1

</llo_original>
